<compile_context>
chip_gen: v5e
topology: v5e:2x2
jax: 0.10.0
libtpu: 0.0.40
codegen_flags: <defaults>
</compile_context>

<pallas_src>
import functools

import jax
import jax.numpy as jnp
from jax import lax
from jax.experimental import pallas as pl
from jax.experimental.pallas import tpu as pltpu


def _round_up(a: int, b: int) -> int:
    return (a + b - 1) // b * b


def _patch_proj_kernel(pT_ref, w_ref, b_ref, o_ref):
    # pT_ref: (1, K, tn)  bf16 im2col^T tile   (K = C*pt*ph*pw, tn = token tile)
    # w_ref : (te, K)     bf16 weight tile
    # b_ref : (te, 1)     f32  bias tile
    # o_ref : (1, te, tn) output tile, channel-first, lane-dense token axis
    acc = jnp.dot(w_ref[...], pT_ref[0], preferred_element_type=jnp.float32)
    o_ref[0] = (acc + b_ref[...]).astype(o_ref.dtype)


def _pick_tiles(E, K, N, out_itemsize):
    """Lane-dense token tiles; weight fully resident whenever it fits."""
    IN = 2                      # bf16 operand bytes
    NP = _round_up(N, 128)
    EP = _round_up(E, 8)
    budget = 30 << 20           # per-step VMEM budget (safe vs v7x 64 MiB/TC)

    def need(te_, tn_):
        return (2 * K * tn_ * IN            # patch tile, double-buffered
                + 2 * te_ * K * IN          # weight (2 bufs, fetched once)
                + 2 * te_ * tn_ * out_itemsize   # output tile, double-buffered
                + 2 * te_ * 4)              # bias

    # Weight-resident (te = EP) => patch matrix streams from HBM exactly once.
    te = EP if EP * K * IN <= (8 << 20) else 256
    if te != EP:
        EP = _round_up(E, te)
    if te == EP and EP > 256 and need(te, 128) > budget:
        te = 256
        EP = _round_up(E, te)

    tn = 128
    for cand in (1024, 512, 256, 128):
        if cand <= NP and NP % cand == 0 and need(te, cand) <= budget:
            tn = cand
            break
    return EP, NP, te, tn, need(te, tn)


def patch_embed_forward(x, weight, bias, patch_length, patch_size):
    B, C, T, H, W = x.shape
    pt = patch_length
    ph, pw = patch_size
    E = weight.shape[0]
    Tp, Hp, Wp = T // pt, H // ph, W // pw
    K = C * pt * ph * pw          # flattened patch size (reduction dim)
    N = Tp * Hp * Wp              # tokens per batch element
    out_dtype = x.dtype
    out_itemsize = jnp.dtype(out_dtype).itemsize

    # ---- transposed im2col, in bf16 (glue; allow_input_fusion lets XLA fuse
    # the transpose/pad into the kernel's first operand; casting *before* the
    # transpose halves the traffic even if it does get materialized). --------
    # (B, C, Tp, pt, Hp, ph, Wp, pw) -> (B, [C,pt,ph,pw]=K, [Tp,Hp,Wp]=N)
    # K order matches the OIDHW flatten of the Conv3d weight.
    xb = x.astype(jnp.bfloat16)
    xp = xb.reshape(B, C, Tp, pt, Hp, ph, Wp, pw)
    xp = xp.transpose(0, 1, 3, 5, 7, 2, 4, 6)
    patches_t = xp.reshape(B, K, N)
    # TODO(synk): if HLO inspection shows the (B,K,N) im2col still materialized
    # despite allow_input_fusion, move the reshape/transpose in-kernel with
    # natural-layout (1, C, pt, rows*ph, W) input blocks.

    w2d = weight.astype(jnp.bfloat16).reshape(E, K)
    b2d = bias.astype(jnp.float32).reshape(E, 1)

    EP, NP, te, tn, vmem_need = _pick_tiles(E, K, N, out_itemsize)

    # Zero-pad ragged edges once; sliced off after the call only if needed.
    if NP != N:
        patches_t = jnp.pad(patches_t, ((0, 0), (0, 0), (0, NP - N)))
    if EP != E:
        w2d = jnp.pad(w2d, ((0, EP - E), (0, 0)))
        b2d = jnp.pad(b2d, ((0, EP - E), (0, 0)))

    # e innermost: the patch tile's block index is constant across it, so the
    # (B, K, N) matrix is never re-fetched even when the weight is tiled.
    grid = (B, NP // tn, EP // te)

    cost = pl.CostEstimate(
        flops=2 * B * N * K * E,
        transcendentals=0,
        bytes_accessed=(B * K * N + E * K) * 2 + E * 4 + B * E * N * out_itemsize,
    )

    vmem_limit = None
    if vmem_need > (20 << 20):
        vmem_limit = min(int(vmem_need * 1.5), 48 << 20)

    out = pl.pallas_call(
        _patch_proj_kernel,
        out_shape=jax.ShapeDtypeStruct((B, EP, NP), out_dtype),
        grid_spec=pltpu.PrefetchScalarGridSpec(
            num_scalar_prefetch=0,
            grid=grid,
            in_specs=[
                pl.BlockSpec((1, K, tn), lambda b, n, e: (b, 0, n)),
                pl.BlockSpec((te, K), lambda b, n, e: (e, 0)),
                pl.BlockSpec((te, 1), lambda b, n, e: (e, 0)),
            ],
            out_specs=pl.BlockSpec((1, te, tn), lambda b, n, e: (b, e, n)),
        ),
        compiler_params=pltpu.CompilerParams(
            dimension_semantics=("parallel", "parallel", "parallel"),
            # Let XLA fuse the im2col transpose/pad into the kernel's first
            # operand instead of materializing (B, K, N) in HBM.
            allow_input_fusion=[True, False, False],
            vmem_limit_bytes=vmem_limit,
        ),
        cost_estimate=cost,
    )(patches_t, w2d, b2d)

    if EP != E or NP != N:
        out = out[:, :E, :N]
    # (B, E, N) -> (B, E, T', H', W'): pure reshape, no transpose pass.
    return out.reshape(B, E, Tp, Hp, Wp)


def _reference_conv3d(x, weight, bias, pt, ph, pw):
    y = lax.conv_general_dilated(
        x, weight,
        window_strides=(pt, ph, pw),
        padding="VALID",
        dimension_numbers=("NCDHW", "OIDHW", "NCDHW"),
    )
    return y + bias.reshape(1, -1, 1, 1, 1)


if __name__ == "__main__":
    # Small PatchEmbed config: video_size=32, video_length=4, patch_size=4,
    # patch_length=2, in_chans=3, embed_dim=32  -> 128 tokens per batch item
    # (lane-dense, no padding needed) with K = 3*2*4*4 = 96.
    B, C, T, H, W = 2, 3, 4, 32, 32
    pt, ph, pw = 2, 4, 4
    E = 32

    key = jax.random.PRNGKey(0)
    kx, kw, kb = jax.random.split(key, 3)
    x = jax.random.normal(kx, (B, C, T, H, W), dtype=jnp.float32)

    # Deterministic synthetic Conv3d parameters:
    #   weight: (embed_dim, in_chans, patch_length, patch_size, patch_size)
    #   bias:   (embed_dim,)
    fan_in = C * pt * ph * pw
    weight = jax.random.normal(kw, (E, C, pt, ph, pw), dtype=jnp.float32) / jnp.sqrt(fan_in)
    bias = jax.random.normal(kb, (E,), dtype=jnp.float32) * 0.01

    fwd = jax.jit(functools.partial(patch_embed_forward,
                                    patch_length=pt, patch_size=(ph, pw)))
    out = jax.block_until_ready(fwd(x, weight, bias))

    ref = _reference_conv3d(x, weight, bias, pt, ph, pw)
    assert out.shape == (B, E, T // pt, H // ph, W // pw), out.shape
    # bf16 operands / f32 accumulation vs f32 reference -> relaxed tolerance.
    max_err = float(jnp.max(jnp.abs(out - ref)))
    assert jnp.allclose(out, ref, atol=5e-2, rtol=5e-2), max_err

    print("KERNEL_OK")
</pallas_src>

<mosaic_0001>
module attributes {stable_mosaic.version = 11 : i64} {
  func.func @_patch_proj_kernel(%arg0: i32, %arg1: i32, %arg2: i32, %arg3: memref<1x96x128xbf16, #tpu.memory_space<vmem>>, %arg4: memref<32x96xbf16, #tpu.memory_space<vmem>>, %arg5: memref<32x1xf32, #tpu.memory_space<vmem>>, %arg6: memref<1x32x128xf32, #tpu.memory_space<vmem>>) attributes {dimension_semantics = [#tpu.dimension_semantics<parallel>, #tpu.dimension_semantics<parallel>, #tpu.dimension_semantics<parallel>], iteration_bounds = array<i64: 2, 1, 1>, scalar_prefetch = 0 : i64, scratch_operands = 0 : i64, tpu.core_type = #tpu.core_type<tc>, window_params = [{transform_indices = @transform_0, window_bounds = array<i64: 1, 96, 128>}, {transform_indices = @transform_1, window_bounds = array<i64: 32, 96>}, {transform_indices = @transform_2, window_bounds = array<i64: 32, 1>}, {transform_indices = @transform_3, window_bounds = array<i64: 1, 32, 128>}]} {
    %c0 = arith.constant 0 : index
    %c0_0 = arith.constant 0 : index
    %0 = vector.load %arg4[%c0, %c0_0] : memref<32x96xbf16, #tpu.memory_space<vmem>>, vector<32x96xbf16>
    %c0_1 = arith.constant 0 : index
    %c0_2 = arith.constant 0 : index
    %c0_3 = arith.constant 0 : index
    %1 = vector.load %arg3[%c0_1, %c0_2, %c0_3] : memref<1x96x128xbf16, #tpu.memory_space<vmem>>, vector<1x96x128xbf16>
    %2 = vector.shape_cast %1 : vector<1x96x128xbf16> to vector<96x128xbf16>
    %cst = arith.constant dense<0.000000e+00> : vector<32x128xf32>
    %3 = tpu.matmul %0, %2, %cst {dimension_numbers = #tpu.dot_dimension_numbers<[1], [0], [0], [1], [0, 0, 1, 1], [], []>} : vector<32x96xbf16>, vector<96x128xbf16>, vector<32x128xf32> -> vector<32x128xf32>
    %c0_4 = arith.constant 0 : index
    %c0_5 = arith.constant 0 : index
    %4 = vector.load %arg5[%c0_4, %c0_5] : memref<32x1xf32, #tpu.memory_space<vmem>>, vector<32x1xf32>
    %5 = vector.broadcast %4 : vector<32x1xf32> to vector<32x128xf32>
    %6 = arith.addf %3, %5 : vector<32x128xf32>
    %c0_6 = arith.constant 0 : index
    %c0_7 = arith.constant 0 : index
    %c0_8 = arith.constant 0 : index
    %7 = vector.load %arg6[%c0_6, %c0_7, %c0_8] : memref<1x32x128xf32, #tpu.memory_space<vmem>>, vector<1x32x128xf32>
    %8 = vector.shape_cast %7 : vector<1x32x128xf32> to vector<32x128xf32>
    %9 = vector.shape_cast %6 : vector<32x128xf32> to vector<1x32x128xf32>
    tpu.vector_store %arg6[%c0_6, %c0_7, %c0_8], %9 {strides = array<i32>} : memref<1x32x128xf32, #tpu.memory_space<vmem>>, vector<1x32x128xf32>,
    return
  }
  func.func @transform_0(%arg0: i32, %arg1: i32, %arg2: i32) -> (i32, i32, i32) {
    %c0_i32 = arith.constant 0 : i32
    %c0_i32_0 = arith.constant 0 : i32
    return %arg0, %c0_i32, %arg1 : i32, i32, i32
  }
  func.func @transform_1(%arg0: i32, %arg1: i32, %arg2: i32) -> (i32, i32) {
    %c0_i32 = arith.constant 0 : i32
    %c0_i32_0 = arith.constant 0 : i32
    return %arg2, %c0_i32 : i32, i32
  }
  func.func @transform_2(%arg0: i32, %arg1: i32, %arg2: i32) -> (i32, i32) {
    %c0_i32 = arith.constant 0 : i32
    %c0_i32_0 = arith.constant 0 : i32
    return %arg2, %c0_i32 : i32, i32
  }
  func.func @transform_3(%arg0: i32, %arg1: i32, %arg2: i32) -> (i32, i32, i32) {
    %c0_i32 = arith.constant 0 : i32
    return %arg0, %arg2, %arg1 : i32, i32, i32
  }
}

</mosaic_0001>

<llo_original>
// kernel: patch_embed_forward.1
$region0: #{patch_embed_forward.1}
  #allocation0 [shape = 'u32[]', space=smem, size = 0x4, offset = 0x4, fixed_abs, tag = 'smem constant byte address 0x4 - core index']
  #allocation1 [shape = 'u32[72,128]{1,0:T(1,128)}', space=vmem, size = 0x9000, scoped, tag = 'internal scratch']
  %s0 = inlined_call_operand.vmem [shape: bf16[2,96,128], index: 0, kind: input, shape index: {}]
  %s1 = inlined_call_operand.vmem [shape: bf16[32,96], index: 1, kind: input, shape index: {}]
  %s2 = inlined_call_operand.vmem [shape: f32[32,1], index: 2, kind: input, shape index: {}]
  %s3 = inlined_call_operand.vmem [shape: f32[2,32,128], index: 3, kind: output, shape index: {}]
  %s4 = sld [smem:[#allocation0]]
  $region45: #{patch_embed_forward.1} parent=0
    _
  %s6 = ssub.s32 1, %s4
  %s7 = scalar_select 0, %s6, %s4
  loop: start=0, step=1, limit=4
  $region2: #{patch_embed_forward.1} parent=0 // loop_pre_header
    _
  $region3: #{patch_embed_forward.1} parent=0 // loop_header
    %s9 = sphi 0, %s13
    %p10 = scmp.ge.s32.totalorder %s9, 4
    %s16 = sphi 0, %s35
    %s17 = sphi 0, %s31
    %s18 = sphi 0, %s27
    %s19 = sphi 0, %s16
    %s20 = sphi 0, %s17
    %s21 = sphi 0, %s18
    %s22 = sphi 0, %s19
    %s23 = sphi 0, %s20
    %s24 = sphi 0, %s21
    %s40 = sphi 0, %s42
    %s43 = sphi 0, %s40
    %s44 = sphi 0, %s43
    %s60 = sphi 0, %s44
    %s66 = sphi 0, %s68
    %s69 = sphi 0, %s66
    %s70 = sphi 0, %s69
    %s86 = sphi 0, %s70
    %s92 = sphi 0, %s94
    %s95 = sphi 0, %s92
    %s96 = sphi 0, %s95
    %s112 = sphi 0, %s96
    %s122 = sphi 0, %s124
    %s125 = sphi 0, %s122
    %s126 = sphi 0, %s125
    %s142 = sphi 0, %s126
  $region4: #{patch_embed_forward.1} parent=0 // loop_header_branch
    %12 = sbr.rel (%p10) target = $region8
  $region5: #{patch_embed_forward.1} parent=0 // loop_body
    %s14 = ssub.s32 %s9, 1
    %s15 = ssub.s32 %s9, 2
    %s25 = sadd.s32 1, %s18
    %p26 = scmp.ge.s32.totalorder %s25, 1
    %s27 = scalar_select %p26, 0, %s25
    %s28 = sadd.s32 1, %s17
    %s29 = scalar_select %p26, %s28, %s17
    %p30 = scmp.ge.s32.totalorder %s29, 1
    %s31 = scalar_select %p30, 0, %s29
    %s32 = sadd.s32 1, %s16
    %s33 = scalar_select %p30, %s32, %s16
    %p34 = scmp.ge.s32.totalorder %s33, 2
    %s35 = scalar_select %p34, 0, %s33
    %s36 = ssub.s32 %s16, %s35
    %s37 = ssub.s32 %s17, %s31
    %s38 = sor.u32 %s36, %s37
    %p39 = scmp.eq.s32.totalorder %s38, 0
    %s41 = sadd.s32 %s40, 1
    %s42 = scalar_select %p39, %s40, %s41
    %p45 = pneg %p39
    %p46 = scmp.eq.s32.totalorder %s9, 1
    %p47 = por %p45, %p46
    %p48 = scmp.ne.s32.totalorder %s40, %s43
    %p49 = scmp.eq.s32.totalorder %s9, 0
    %p50 = por %p48, %p49
    %p51 = scmp.ne.s32.totalorder %s40, %s43
    %p52 = scmp.eq.s32.totalorder %s14, 1
    %p53 = por %p51, %p52
    %p54 = scmp.ne.s32.totalorder %s43, %s44
    %p55 = scmp.eq.s32.totalorder %s14, 0
    %p56 = por %p54, %p55
    %p57 = scmp.ne.s32.totalorder %s43, %s44
    %p58 = scmp.eq.s32.totalorder %s15, 1
    %p59 = por %p57, %p58
    %p61 = scmp.ne.s32.totalorder %s44, %s60
    %p62 = scmp.eq.s32.totalorder %s15, 0
    %p63 = por %p61, %p62
    %s64 = ssub.s32 %s18, %s27
    %p65 = scmp.eq.s32.totalorder %s64, 0
    %s67 = sadd.s32 %s66, 1
    %s68 = scalar_select %p65, %s66, %s67
    %p71 = pneg %p65
    %p72 = scmp.eq.s32.totalorder %s9, 1
    %p73 = por %p71, %p72
    %p74 = scmp.ne.s32.totalorder %s66, %s69
    %p75 = scmp.eq.s32.totalorder %s9, 0
    %p76 = por %p74, %p75
    %p77 = scmp.ne.s32.totalorder %s66, %s69
    %p78 = scmp.eq.s32.totalorder %s14, 1
    %p79 = por %p77, %p78
    %p80 = scmp.ne.s32.totalorder %s69, %s70
    %p81 = scmp.eq.s32.totalorder %s14, 0
    %p82 = por %p80, %p81
    %p83 = scmp.ne.s32.totalorder %s69, %s70
    %p84 = scmp.eq.s32.totalorder %s15, 1
    %p85 = por %p83, %p84
    %p87 = scmp.ne.s32.totalorder %s70, %s86
    %p88 = scmp.eq.s32.totalorder %s15, 0
    %p89 = por %p87, %p88
    %s90 = ssub.s32 %s18, %s27
    %p91 = scmp.eq.s32.totalorder %s90, 0
    %s93 = sadd.s32 %s92, 1
    %s94 = scalar_select %p91, %s92, %s93
    %p97 = pneg %p91
    %p98 = scmp.eq.s32.totalorder %s9, 1
    %p99 = por %p97, %p98
    %p100 = scmp.ne.s32.totalorder %s92, %s95
    %p101 = scmp.eq.s32.totalorder %s9, 0
    %p102 = por %p100, %p101
    %p103 = scmp.ne.s32.totalorder %s92, %s95
    %p104 = scmp.eq.s32.totalorder %s14, 1
    %p105 = por %p103, %p104
    %p106 = scmp.ne.s32.totalorder %s95, %s96
    %p107 = scmp.eq.s32.totalorder %s14, 0
    %p108 = por %p106, %p107
    %p109 = scmp.ne.s32.totalorder %s95, %s96
    %p110 = scmp.eq.s32.totalorder %s15, 1
    %p111 = por %p109, %p110
    %p113 = scmp.ne.s32.totalorder %s96, %s112
    %p114 = scmp.eq.s32.totalorder %s15, 0
    %p115 = por %p113, %p114
    %s116 = ssub.s32 %s16, %s35
    %s117 = ssub.s32 %s18, %s27
    %s118 = sor.u32 %s116, %s117
    %s119 = ssub.s32 %s17, %s31
    %s120 = sor.u32 %s118, %s119
    %p121 = scmp.eq.s32.totalorder %s120, 0
    %s123 = sadd.s32 %s122, 1
    %s124 = scalar_select %p121, %s122, %s123
    %p127 = pneg %p121
    %p128 = scmp.eq.s32.totalorder %s9, 1
    %p129 = por %p127, %p128
    %p130 = scmp.ne.s32.totalorder %s122, %s125
    %p131 = scmp.eq.s32.totalorder %s9, 0
    %p132 = por %p130, %p131
    %p133 = scmp.ne.s32.totalorder %s122, %s125
    %p134 = scmp.eq.s32.totalorder %s14, 1
    %p135 = por %p133, %p134
    %p136 = scmp.ne.s32.totalorder %s125, %s126
    %p137 = scmp.eq.s32.totalorder %s14, 0
    %p138 = por %p136, %p137
    %p139 = scmp.ne.s32.totalorder %s125, %s126
    %p140 = scmp.eq.s32.totalorder %s15, 1
    %p141 = por %p139, %p140
    %p143 = scmp.ne.s32.totalorder %s126, %s142
    %p144 = scmp.eq.s32.totalorder %s15, 0
    %p145 = por %p143, %p144
    %p146 = scmp.le.s32.totalorder 1, %s9
    %p147 = scmp.lt.s32.totalorder %s9, 3
    %p148 = pnand %p146, %p147
    %p149 = pneg %p148
    // Predicated region
    $region9: #{patch_embed_forward.1} parent=5 // pred_check
      _
    $region10: #{patch_embed_forward.1} parent=5 // pred_check_branch
      %151 = sbr.rel (%p148) target = $region12
    $region11: #{patch_embed_forward.1} parent=5 // pred_region
      %s152 = ssub.s32 %s9, 1
      // Predicated region
      $region13: #{patch_embed_forward.1} parent=11 // pred_check
        %p153 = pneg %p82
      $region14: #{patch_embed_forward.1} parent=11 // pred_check_branch
        %155 = sbr.rel (%p153) target = $region16
      $region15: #{patch_embed_forward.1} parent=11 // pred_region
        %s156 = smul.u32 4, %s21
        %p157 = scmp.lt.s32.totalorder %s156, 3
        %s158 = scalar_select %p157, %s156, 3
        %s159 = smul.addr %s158, 4
        %s160 = scalar_lea.vmem %s1, %s159
        %s161 = smul.u32 4, %s21
      $region16: #{patch_embed_forward.1} parent=11 // pred_fallthru
        _
      // Predicated region
      $region17: #{patch_embed_forward.1} parent=11 // pred_check
        %p162 = pneg %p108
      $region18: #{patch_embed_forward.1} parent=11 // pred_check_branch
        %164 = sbr.rel (%p162) target = $region20
      $region19: #{patch_embed_forward.1} parent=11 // pred_region
        %s165 = smul.u32 4, %s21
        %p166 = scmp.lt.s32.totalorder %s165, 3
        %s167 = scalar_select %p166, %s165, 3
        %s168 = smul.addr %s167, 8
        %s169 = scalar_lea.vmem %s2, %s168
        %s170 = smul.u32 4, %s21
      $region20: #{patch_embed_forward.1} parent=11 // pred_fallthru
        _
    $region12: #{patch_embed_forward.1} parent=5 // pred_fallthru
      _
    %p171 = scmp.lt.s32.totalorder %s9, 2
    // Predicated region
    $region21: #{patch_embed_forward.1} parent=5 // pred_check
      %p172 = pneg %p171
    $region22: #{patch_embed_forward.1} parent=5 // pred_check_branch
      %174 = sbr.rel (%p172) target = $region24
    $region23: #{patch_embed_forward.1} parent=5 // pred_region
      // Predicated region
      $region25: #{patch_embed_forward.1} parent=23 // pred_check
        %p175 = pneg %p50
      $region26: #{patch_embed_forward.1} parent=23 // pred_check_branch
        %177 = sbr.rel (%p175) target = $region28
      $region27: #{patch_embed_forward.1} parent=23 // pred_region
        %p178 = scmp.lt.s32.totalorder %s16, 1
        %s179 = scalar_select %p178, %s16, 1
        %p180 = scmp.lt.s32.totalorder %s17, 0
        %s181 = scalar_select %p180, %s17, 0
        %s182 = smul.addr %s179, 12
        %s183 = sadd.s32 %s181, %s182
        %s184 = smul.addr %s183, 4
        %s185 = scalar_lea.vmem %s0, %s184
      $region28: #{patch_embed_forward.1} parent=23 // pred_fallthru
        _
    $region24: #{patch_embed_forward.1} parent=5 // pred_fallthru
      _
    %p186 = scmp.le.s32.totalorder 1, %s9
    %p187 = scmp.lt.s32.totalorder %s9, 3
    %p188 = pnand %p186, %p187
    %p189 = pneg %p188
    // Predicated region
    $region29: #{patch_embed_forward.1} parent=5 // pred_check
      _
    $region30: #{patch_embed_forward.1} parent=5 // pred_check_branch
      %191 = sbr.rel (%p188) target = $region32
    $region31: #{patch_embed_forward.1} parent=5 // pred_region
      %s192 = ssub.s32 %s9, 1
      %p193 = scmp.lt.s32.totalorder %s19, 1
      %s194 = scalar_select %p193, %s19, 1
      %p195 = scmp.lt.s32.totalorder %s20, 0
      %s196 = scalar_select %p195, %s20, 0
      %s197 = smul.addr %s194, 12
      %s198 = sadd.s32 %s196, %s197
      %s199 = smul.addr %s198, 4
      %s200 = scalar_lea.vmem %s0, %s199
      %p201 = pneg %p56
      %p202 = pneg %p53
      %s203 = smul.u32 4, %s21
      %p204 = scmp.lt.s32.totalorder %s203, 3
      %s205 = scalar_select %p204, %s203, 3
      %s206 = smul.addr %s205, 4
      %s207 = scalar_lea.vmem %s1, %s206
      %p208 = pneg %p82
      %p209 = pneg %p79
      %s210 = smul.u32 4, %s21
      %p211 = scmp.lt.s32.totalorder %s210, 3
      %s212 = scalar_select %p211, %s210, 3
      %s213 = smul.addr %s212, 8
      %s214 = scalar_lea.vmem %s2, %s213
      %p215 = pneg %p108
      %p216 = pneg %p105
      %p217 = pneg %p138
      %p218 = pneg %p135
      %s219 = smul.u32 4, %s21
      %p220 = scmp.lt.s32.totalorder %s19, 1
      %s221 = scalar_select %p220, %s19, 1
      %p222 = scmp.lt.s32.totalorder %s219, 3
      %s223 = scalar_select %p222, %s219, 3
      %p224 = scmp.lt.s32.totalorder %s20, 0
      %s225 = scalar_select %p224, %s20, 0
      %s226 = sadd.s32 %s225, %s223
      %s227 = smul.addr %s221, 4
      %s228 = sadd.s32 %s226, %s227
      %s229 = smul.addr %s228, 8
      %s230 = scalar_lea.vmem %s3, %s229
      %p231 = scmp.lt.s32.totalorder %s19, 1
      %s232 = scalar_select %p231, %s19, 1
      %p233 = scmp.lt.s32.totalorder %s20, 0
      %s234 = scalar_select %p233, %s20, 0
      %s235 = smul.addr %s232, 12
      %s236 = sadd.s32 %s234, %s235
      %s237 = smul.addr %s236, 4
      %s238 = scalar_lea.vmem %s0, %s237
      %s239 = smul.u32 4, %s21
      %p240 = scmp.lt.s32.totalorder %s239, 3
      %s241 = scalar_select %p240, %s239, 3
      %s242 = smul.addr %s241, 4
      %s243 = scalar_lea.vmem %s1, %s242
      %s244 = smul.u32 4, %s21
      %s245 = smul.u32 4, %s21
      %p246 = scmp.lt.s32.totalorder %s245, 3
      %s247 = scalar_select %p246, %s245, 3
      %s248 = smul.addr %s247, 8
      %s249 = scalar_lea.vmem %s2, %s248
      %s250 = smul.u32 4, %s21
      %s251 = smul.u32 4, %s21
      %p252 = scmp.lt.s32.totalorder %s19, 1
      %s253 = scalar_select %p252, %s19, 1
      %p254 = scmp.lt.s32.totalorder %s251, 3
      %s255 = scalar_select %p254, %s251, 3
      %p256 = scmp.lt.s32.totalorder %s20, 0
      %s257 = scalar_select %p256, %s20, 0
      %s258 = sadd.s32 %s257, %s255
      %s259 = smul.addr %s253, 4
      %s260 = sadd.s32 %s258, %s259
      %s261 = smul.addr %s260, 8
      %s262 = scalar_lea.vmem %s3, %s261
      %s263 = smul.u32 4, %s21
      %v265 = vld [vmem:[%s243] sm:$0xf]
      %v266 = vld [vmem:[%s243 + $0x4] sm:$0xf]
      %v267 = vld [vmem:[%s243 + $0x8] sm:$0xf]
      %v268 = vld [vmem:[%s243 + $0xc] sm:$0xf]
      %v269 = vld [vmem:[%s238] sm:$0xf]
      %v270 = vld [vmem:[%s238 + $0x4] sm:$0xf]
      %v271 = vld [vmem:[%s238 + $0x8] sm:$0xf]
      %v272 = vld [vmem:[%s238 + $0xc] sm:$0xf]
      %v273 = vld [vmem:[%s238 + $0x10] sm:$0xf]
      %v274 = vld [vmem:[%s238 + $0x14] sm:$0xf]
      %v275 = vld [vmem:[%s238 + $0x18] sm:$0xf]
      %v276 = vld [vmem:[%s238 + $0x1c] sm:$0xf]
      %v277 = vld [vmem:[%s238 + $0x20] sm:$0xf]
      %v278 = vld [vmem:[%s238 + $0x24] sm:$0xf]
      %v279 = vld [vmem:[%s238 + $0x28] sm:$0xf]
      %v280 = vld [vmem:[%s238 + $0x2c] sm:$0xf]
      %v281 = vld [vmem:[%s249] sm:$0xff]
      %v282 = vld [vmem:[%s249 + $0x8] sm:$0xff]
      %v283 = vld [vmem:[%s249 + $0x10] sm:$0xff]
      %v284 = vld [vmem:[%s249 + $0x18] sm:$0xff]
      %286 = vset.pattern.permute.xlu0 0
      %287 = vperm.xlu0 %286, %v281
      %v288 = vpop.permute.xlu0 %287
      %291 = vset.pattern.permute.xlu0 0
      %292 = vperm.xlu0 %291, %v282
      %v293 = vpop.permute.xlu0 %292
      %296 = vset.pattern.permute.xlu0 0
      %297 = vperm.xlu0 %296, %v283
      %v298 = vpop.permute.xlu0 %297
      %301 = vset.pattern.permute.xlu0 0
      %302 = vperm.xlu0 %301, %v284
      %v303 = vpop.permute.xlu0 %302
      %v309 = vunpack.c.l.b16 %v265
      %v310 = vunpack.c.l.b16 %v266
      %v311 = vunpack.c.l.b16 %v267
      %v312 = vunpack.c.l.b16 %v268
      %v313 = vpack.c.b16 %v310, %v309
      %v314 = vpack.c.b16 %v312, %v311
      %v327 = vunpack.c.l.b16 %v269
      %v328 = vunpack.c.l.b16 %v270
      %v329 = vunpack.c.l.b16 %v271
      %v330 = vunpack.c.l.b16 %v272
      %v331 = vunpack.c.l.b16 %v273
      %v332 = vunpack.c.l.b16 %v274
      %v333 = vunpack.c.l.b16 %v275
      %v334 = vunpack.c.l.b16 %v276
      %v335 = vunpack.c.l.b16 %v277
      %v336 = vunpack.c.l.b16 %v278
      %v337 = vunpack.c.l.b16 %v279
      %v338 = vunpack.c.l.b16 %v280
      %v339 = vpack.c.b16 %v328, %v327
      %v340 = vpack.c.b16 %v330, %v329
      %v341 = vpack.c.b16 %v332, %v331
      %v342 = vpack.c.b16 %v334, %v333
      %v343 = vpack.c.b16 %v336, %v335
      %v344 = vpack.c.b16 %v338, %v337
      %vm351 = vcmask 785408
      %v353 = vsel %vm351, %v313, 0
      %v356 = vsel %vm351, %v314, 0
      %358 = vmatpush.bf16.msra.mxu0 0
      %359 = vmatpush.bf16.msra.mxu0 0
      %360 = vmatpush.bf16.msra.mxu0 %v344
      %361 = vmatpush.bf16.msra.mxu0 %v343
      %362 = vmatpush.bf16.msra.mxu0 %v342
      %363 = vmatpush.bf16.msra.mxu0 %v341
      %364 = vmatpush.bf16.msra.mxu0 %v340
      %365 = vmatpush.bf16.msra.mxu0 %v339
      %366 = vmatmul.bf16.gmra.mxu0 %v353
      %v367 = vpop.f32.mrf.mxu0
      %v368 = vadd.f32 %v288, %v367
      %v369 = vpop.f32.mrf.mxu0
      %v370 = vadd.f32 %v293, %v369
      %371 = vmatmul.bf16.gmra.mxu0 %v356
      %v372 = vpop.f32.mrf.mxu0
      %v373 = vadd.f32 %v298, %v372
      %v374 = vpop.f32.mrf.mxu0
      %v375 = vadd.f32 %v303, %v374
      %376 = vdwg.mxu0
      %377 = vst [vmem:[%s262] sm:$0xff] %v368
      %378 = vst [vmem:[%s262 + $0x8] sm:$0xff] %v370
      %379 = vst [vmem:[%s262 + $0x10] sm:$0xff] %v373
      %380 = vst [vmem:[%s262 + $0x18] sm:$0xff] %v375
      %s381 = smul.u32 4, %s21
      %p382 = scmp.lt.s32.totalorder %s19, 1
      %s383 = scalar_select %p382, %s19, 1
      %p384 = scmp.lt.s32.totalorder %s381, 3
      %s385 = scalar_select %p384, %s381, 3
      %p386 = scmp.lt.s32.totalorder %s20, 0
      %s387 = scalar_select %p386, %s20, 0
      %s388 = sadd.s32 %s387, %s385
      %s389 = smul.addr %s383, 4
      %s390 = sadd.s32 %s388, %s389
      %s391 = smul.addr %s390, 8
      %s392 = scalar_lea.vmem %s3, %s391
      // Predicated region
      $region33: #{patch_embed_forward.1} parent=31 // pred_check
        %p393 = pneg %p135
      $region34: #{patch_embed_forward.1} parent=31 // pred_check_branch
        %395 = sbr.rel (%p393) target = $region36
      $region35: #{patch_embed_forward.1} parent=31 // pred_region
        %s396 = smul.u32 4, %s21
      $region36: #{patch_embed_forward.1} parent=31 // pred_fallthru
        _
    $region32: #{patch_embed_forward.1} parent=5 // pred_fallthru
      _
    %p397 = scmp.le.s32.totalorder 2, %s9
    // Predicated region
    $region37: #{patch_embed_forward.1} parent=5 // pred_check
      %p398 = pneg %p397
    $region38: #{patch_embed_forward.1} parent=5 // pred_check_branch
      %400 = sbr.rel (%p398) target = $region40
    $region39: #{patch_embed_forward.1} parent=5 // pred_region
      %s401 = ssub.s32 %s9, 2
      // Predicated region
      $region41: #{patch_embed_forward.1} parent=39 // pred_check
        %p402 = pneg %p141
      $region42: #{patch_embed_forward.1} parent=39 // pred_check_branch
        %404 = sbr.rel (%p402) target = $region44
      $region43: #{patch_embed_forward.1} parent=39 // pred_region
        %s405 = smul.u32 4, %s24
        %p406 = scmp.lt.s32.totalorder %s22, 1
        %s407 = scalar_select %p406, %s22, 1
        %p408 = scmp.lt.s32.totalorder %s405, 3
        %s409 = scalar_select %p408, %s405, 3
        %p410 = scmp.lt.s32.totalorder %s23, 0
        %s411 = scalar_select %p410, %s23, 0
        %s412 = sadd.s32 %s411, %s409
        %s413 = smul.addr %s407, 4
        %s414 = sadd.s32 %s412, %s413
        %s415 = smul.addr %s414, 8
        %s416 = scalar_lea.vmem %s3, %s415
      $region44: #{patch_embed_forward.1} parent=39 // pred_fallthru
        _
    $region40: #{patch_embed_forward.1} parent=5 // pred_fallthru
      _
  $region6: #{patch_embed_forward.1} parent=0 // loop_footer
    %s13 = sadd.s32 1, %s9
  $region7: #{patch_embed_forward.1} parent=0 // loop_footer_branch
    %8 = sbr.rel target = $region3
  $region8: #{patch_embed_forward.1} parent=0 // loop_exit
    _

</llo_original>
